<compile_context>
chip_gen: v6e
topology: v6e:2x2x1
jax: 0.10.0
libtpu: 0.0.40
codegen_flags: <defaults>
</compile_context>

<pallas_src>
import jax
import jax.numpy as jnp
from jax.experimental import pallas as pl
from jax.experimental.pallas import tpu as pltpu

CHUNK = 512  # samples per in-kernel chunk (multiple of 128)


def _dice_partials_kernel(logits_ref, tgt_ref, out_ref):
    """logits_ref: (CPB, F, CHUNK) native dtype -- CPB chunks of CHUNK samples.
    tgt_ref:    (CPB, 1, CHUNK) int32 class ids (pad columns carry id = F).
    out_ref:    (1, 2, F, 128) f32 resident accumulator: [inter, union]."""
    i = pl.program_id(1)

    @pl.when(i == 0)
    def _init():
        out_ref[...] = jnp.zeros_like(out_ref)

    cpb, n_class, ch = logits_ref.shape
    n_fold = ch // 128

    class_iota = jax.lax.broadcasted_iota(jnp.int32, (n_class, ch), 0)

    def chunk_body(k, carry):
        inter_c, union_c = carry
        x = logits_ref[k]                                        # (F, CH)
        t = tgt_ref[k]                                           # (1, CH) int32

        # argmax over classes (sublane axis), first-max tie-break (= torch.argmax).
        col_max = jnp.max(x, axis=0, keepdims=True)              # (1, CH)
        is_max = x == col_max                                    # (F, CH)
        pred_idx = jnp.min(jnp.where(is_max, class_iota, n_class),
                           axis=0, keepdims=True)                # (1, CH) int32

        pred_oh = (class_iota == pred_idx).astype(jnp.float32)   # (F, CH)
        tgt_oh = (class_iota == t).astype(jnp.float32)           # (F, CH)
        inter = pred_oh * tgt_oh                                 # both one
        union = pred_oh + tgt_oh                                 # pred^2 + tgt^2

        # Fold CH -> 128 lanes with pure vreg adds; carries stay in vregs.
        for s in range(n_fold):
            sl = slice(s * 128, (s + 1) * 128)
            inter_c = inter_c + inter[:, sl]
            union_c = union_c + union[:, sl]
        return inter_c, union_c

    zeros = jnp.zeros((n_class, 128), jnp.float32)
    inter_c, union_c = jax.lax.fori_loop(
        0, cpb, chunk_body, (zeros, zeros), unroll=min(8, cpb))

    # One vreg-width read-modify-write per grid step.
    out_ref[0, 0] = out_ref[0, 0] + inter_c
    out_ref[0, 1] = out_ref[0, 1] + union_c


def _round_up(x, m):
    return (x + m - 1) // m * m


def _pick_tile_lanes(V, F, itemsize, num_cores, *, vmem_budget_bytes, max_lanes):
    """Largest per-step lane count whose double-buffered inputs fit the budget.
    Budget default is safe for every generation's default scoped VMEM."""
    f_pad = _round_up(max(F, 1), 8)
    # double-buffered logits + sublane-padded i32 target per sample.
    per_lane = 2 * (f_pad * itemsize + 8 * 4)
    tv = (vmem_budget_bytes // per_lane) // CHUNK * CHUNK
    tv = max(CHUNK, min(tv, max_lanes))
    lanes_per_core = _round_up(-(-V // num_cores), CHUNK)
    return min(tv, lanes_per_core)


def dice(output, target, segments=None, *, num_cores=2, tile_lanes=None,
         vmem_budget_bytes=12 * 1024 * 1024, max_lanes=65536):
    """output: (V, F) logits (any float dtype); target: (V,) or (V, 1) class ids.
    Returns (F,) per-class dice score (same semantics as the torch module)."""
    V, F = output.shape
    if tile_lanes is None:
        tile_lanes = _pick_tile_lanes(V, F, output.dtype.itemsize, num_cores,
                                      vmem_budget_bytes=vmem_budget_bytes,
                                      max_lanes=max_lanes)
    tv = max(CHUNK, (tile_lanes // CHUNK) * CHUNK)   # lanes per grid step
    cpb = tv // CHUNK                                # chunks per grid step

    lanes_per_core = -(-V // num_cores)
    n_inner = -(-lanes_per_core // tv)
    v_pad = num_cores * n_inner * tv
    pad = v_pad - V
    nc = v_pad // CHUNK                              # total chunks

    # Chunk-major, lane-dense layout: (NC, F, CHUNK).
    # Pad columns are all-zero logits (=> argmax class 0, corrected exactly
    # below) and target id F (matches no class): no in-kernel masking needed.
    # TODO(synk): have the upstream producer emit this chunk-major layout
    # directly (fold it into the preceding matmul) so this relayout pass
    # disappears.
    x = output
    if pad:
        x = jnp.pad(x, ((0, pad), (0, 0)))
    logits3 = x.reshape(nc, CHUNK, F).transpose(0, 2, 1)

    t = jnp.reshape(target, (-1,)).astype(jnp.int32)
    if pad:
        t = jnp.pad(t, (0, pad), constant_values=F)
    tgt3 = t.reshape(nc, 1, CHUNK)

    parts = pl.pallas_call(
        _dice_partials_kernel,
        out_shape=jax.ShapeDtypeStruct((num_cores, 2, F, 128), jnp.float32),
        grid_spec=pltpu.PrefetchScalarGridSpec(
            num_scalar_prefetch=0,
            grid=(num_cores, n_inner),
            in_specs=[
                pl.BlockSpec((cpb, F, CHUNK), lambda c, i: (c * n_inner + i, 0, 0)),
                pl.BlockSpec((cpb, 1, CHUNK), lambda c, i: (c * n_inner + i, 0, 0)),
            ],
            out_specs=pl.BlockSpec((1, 2, F, 128), lambda c, i: (c, 0, 0, 0)),
        ),
        compiler_params=pltpu.CompilerParams(
            dimension_semantics=("parallel", "arbitrary"),
            vmem_limit_bytes=32 * 1024 * 1024),
    )(logits3, tgt3)

    # Tiny epilogue: combine per-core / per-lane partials, undo padding.
    sums = parts.sum(axis=(0, 3))                    # (2, F)
    inter = sums[0]
    union = sums[1]
    if pad:
        union = union.at[0].add(-float(pad))         # padded columns predicted class 0
    return 2.0 * inter / (union + 1e-10)


def dice_ref(output, target):
    """Pure-JAX reference replicating the torch forward exactly."""
    V, F = output.shape
    pred_idx = jnp.argmax(output, axis=1)
    pred = jax.nn.one_hot(pred_idx, F, dtype=jnp.float32)
    tgt = jax.nn.one_hot(jnp.reshape(target, (V,)), F, dtype=jnp.float32)
    intersection = 2.0 * (pred * tgt).sum(0)
    union = (pred ** 2).sum(0) + (tgt ** 2).sum(0)
    return intersection / (union + 1e-10)


if __name__ == "__main__":
    key = jax.random.PRNGKey(0)
    k1, k2, k3, k4, k5 = jax.random.split(key, 5)

    F = 8

    # Case 1: tiny single-tile input (module-style call with unused segments).
    V1 = 64
    out1 = jax.random.normal(k1, (V1, F), dtype=jnp.float32)
    tgt1 = jax.random.randint(k2, (V1, 1), 0, F, dtype=jnp.int32)
    seg1 = jax.random.randint(k3, (V1, 1), 0, 4, dtype=jnp.int32)  # unused
    s1 = jax.block_until_ready(dice(out1, tgt1, seg1))
    e1 = dice_ref(out1, tgt1)
    assert s1.shape == (F,)
    assert jnp.allclose(s1, e1, atol=1e-6), (s1, e1)

    # Case 2: ragged V. Default dual-core split, plus a single-core run with a
    # small tile to exercise the multi-step resident-accumulator path.
    V2 = 1000
    out2 = jax.random.normal(k4, (V2, F), dtype=jnp.float32)
    tgt2 = jax.random.randint(k5, (V2,), 0, F, dtype=jnp.int32)
    e2 = dice_ref(out2, tgt2)
    s2 = jax.block_until_ready(dice(out2, tgt2))
    assert jnp.allclose(s2, e2, atol=1e-6), (s2, e2)
    s3 = jax.block_until_ready(dice(out2, tgt2, num_cores=1, tile_lanes=512))
    assert jnp.allclose(s3, e2, atol=1e-6), (s3, e2)

    print("KERNEL_OK")
</pallas_src>

<mosaic_0001>
module attributes {stable_mosaic.version = 11 : i64} {
  func.func @_dice_partials_kernel(%arg0: i32, %arg1: i32, %arg2: memref<1x8x512xf32, #tpu.memory_space<vmem>>, %arg3: memref<1x1x512xi32, #tpu.memory_space<vmem>>, %arg4: memref<1x2x8x128xf32, #tpu.memory_space<vmem>>) attributes {dimension_semantics = [#tpu.dimension_semantics<parallel>, #tpu.dimension_semantics<arbitrary>], iteration_bounds = array<i64: 2, 1>, scalar_prefetch = 0 : i64, scratch_operands = 0 : i64, tpu.core_type = #tpu.core_type<tc>, window_params = [{transform_indices = @transform_0, window_bounds = array<i64: 1, 8, 512>}, {transform_indices = @transform_1, window_bounds = array<i64: 1, 1, 512>}, {transform_indices = @transform_2, window_bounds = array<i64: 1, 2, 8, 128>}]} {
    %c0_i32 = arith.constant 0 : i32
    %0 = arith.cmpi eq, %arg1, %c0_i32 : i32
    %1 = arith.extui %0 : i1 to i32
    %c0_i32_0 = arith.constant 0 : i32
    %2 = arith.cmpi ne, %1, %c0_i32_0 : i32
    scf.if %2 {
      %cst_22 = arith.constant 0.000000e+00 : f32
      %57 = vector.broadcast %cst_22 : f32 to vector<1x2x8x128xf32>
      %c0_23 = arith.constant 0 : index
      %c0_24 = arith.constant 0 : index
      %c0_25 = arith.constant 0 : index
      %c0_26 = arith.constant 0 : index
      %58 = vector.load %arg4[%c0_23, %c0_24, %c0_25, %c0_26] : memref<1x2x8x128xf32, #tpu.memory_space<vmem>>, vector<1x2x8x128xf32>
      tpu.vector_store %arg4[%c0_23, %c0_24, %c0_25, %c0_26], %57 {strides = array<i32>} : memref<1x2x8x128xf32, #tpu.memory_space<vmem>>, vector<1x2x8x128xf32>,
    } else {
    }
    %3 = tpu.iota {dimensions = array<i32: 0>} : vector<8x512xi32>
    %cst = arith.constant 0.000000e+00 : f32
    %4 = vector.broadcast %cst : f32 to vector<8x128xf32>
    %c0_i32_1 = arith.constant 0 : i32
    %5 = arith.index_cast %c0_i32_1 : i32 to index
    %c0 = arith.constant 0 : index
    %c0_2 = arith.constant 0 : index
    %6 = vector.load %arg2[%5, %c0, %c0_2] : memref<1x8x512xf32, #tpu.memory_space<vmem>>, vector<1x8x512xf32>
    %7 = vector.shape_cast %6 : vector<1x8x512xf32> to vector<8x512xf32>
    %8 = arith.index_cast %c0_i32_1 : i32 to index
    %c0_3 = arith.constant 0 : index
    %c0_4 = arith.constant 0 : index
    %9 = vector.load %arg3[%8, %c0_3, %c0_4] : memref<1x1x512xi32, #tpu.memory_space<vmem>>, vector<1x1x512xi32>
    %10 = vector.shape_cast %9 : vector<1x1x512xi32> to vector<1x512xi32>
    %cst_5 = arith.constant dense<0xFF800000> : vector<512xf32>
    %11 = vector.multi_reduction <maximumf>, %7, %cst_5 [0] : vector<8x512xf32> to vector<512xf32>
    %12 = vector.shape_cast %11 : vector<512xf32> to vector<1x512xf32>
    %13 = vector.broadcast %12 : vector<1x512xf32> to vector<8x512xf32>
    %14 = arith.cmpf oeq, %7, %13 : vector<8x512xf32>
    %c8_i32 = arith.constant 8 : i32
    %15 = vector.broadcast %c8_i32 : i32 to vector<8x512xi32>
    %16 = arith.select %14, %3, %15 : vector<8x512xi1>, vector<8x512xi32>
    %cst_6 = arith.constant dense<2147483647> : vector<512xi32>
    %17 = vector.multi_reduction <minsi>, %16, %cst_6 [0] : vector<8x512xi32> to vector<512xi32>
    %18 = vector.shape_cast %17 : vector<512xi32> to vector<1x512xi32>
    %19 = vector.broadcast %18 : vector<1x512xi32> to vector<8x512xi32>
    %20 = arith.cmpi eq, %3, %19 : vector<8x512xi32>
    %21 = arith.extui %20 : vector<8x512xi1> to vector<8x512xi32>
    %22 = arith.sitofp %21 : vector<8x512xi32> to vector<8x512xf32>
    %23 = vector.broadcast %10 : vector<1x512xi32> to vector<8x512xi32>
    %24 = arith.cmpi eq, %3, %23 : vector<8x512xi32>
    %25 = arith.extui %24 : vector<8x512xi1> to vector<8x512xi32>
    %26 = arith.sitofp %25 : vector<8x512xi32> to vector<8x512xf32>
    %27 = arith.mulf %22, %26 : vector<8x512xf32>
    %28 = arith.addf %22, %26 : vector<8x512xf32>
    %29 = vector.extract_strided_slice %27 {offsets = [0, 0], sizes = [8, 128], strides = [1, 1]} : vector<8x512xf32> to vector<8x128xf32>
    %30 = arith.addf %4, %29 : vector<8x128xf32>
    %31 = vector.extract_strided_slice %28 {offsets = [0, 0], sizes = [8, 128], strides = [1, 1]} : vector<8x512xf32> to vector<8x128xf32>
    %32 = arith.addf %4, %31 : vector<8x128xf32>
    %33 = vector.extract_strided_slice %27 {offsets = [0, 128], sizes = [8, 128], strides = [1, 1]} : vector<8x512xf32> to vector<8x128xf32>
    %34 = arith.addf %30, %33 : vector<8x128xf32>
    %35 = vector.extract_strided_slice %28 {offsets = [0, 128], sizes = [8, 128], strides = [1, 1]} : vector<8x512xf32> to vector<8x128xf32>
    %36 = arith.addf %32, %35 : vector<8x128xf32>
    %37 = vector.extract_strided_slice %27 {offsets = [0, 256], sizes = [8, 128], strides = [1, 1]} : vector<8x512xf32> to vector<8x128xf32>
    %38 = arith.addf %34, %37 : vector<8x128xf32>
    %39 = vector.extract_strided_slice %28 {offsets = [0, 256], sizes = [8, 128], strides = [1, 1]} : vector<8x512xf32> to vector<8x128xf32>
    %40 = arith.addf %36, %39 : vector<8x128xf32>
    %41 = vector.extract_strided_slice %27 {offsets = [0, 384], sizes = [8, 128], strides = [1, 1]} : vector<8x512xf32> to vector<8x128xf32>
    %42 = arith.addf %38, %41 : vector<8x128xf32>
    %43 = vector.extract_strided_slice %28 {offsets = [0, 384], sizes = [8, 128], strides = [1, 1]} : vector<8x512xf32> to vector<8x128xf32>
    %44 = arith.addf %40, %43 : vector<8x128xf32>
    %c1_i32 = arith.constant 1 : i32
    %c0_7 = arith.constant 0 : index
    %c0_8 = arith.constant 0 : index
    %c0_9 = arith.constant 0 : index
    %c0_10 = arith.constant 0 : index
    %45 = vector.load %arg4[%c0_7, %c0_8, %c0_9, %c0_10] : memref<1x2x8x128xf32, #tpu.memory_space<vmem>>, vector<1x1x8x128xf32>
    %46 = vector.shape_cast %45 : vector<1x1x8x128xf32> to vector<8x128xf32>
    %47 = arith.addf %46, %42 : vector<8x128xf32>
    %c0_11 = arith.constant 0 : index
    %c0_12 = arith.constant 0 : index
    %c0_13 = arith.constant 0 : index
    %c0_14 = arith.constant 0 : index
    %48 = vector.load %arg4[%c0_11, %c0_12, %c0_13, %c0_14] : memref<1x2x8x128xf32, #tpu.memory_space<vmem>>, vector<1x1x8x128xf32>
    %49 = vector.shape_cast %48 : vector<1x1x8x128xf32> to vector<8x128xf32>
    %50 = vector.shape_cast %47 : vector<8x128xf32> to vector<1x1x8x128xf32>
    tpu.vector_store %arg4[%c0_11, %c0_12, %c0_13, %c0_14], %50 {strides = array<i32>} : memref<1x2x8x128xf32, #tpu.memory_space<vmem>>, vector<1x1x8x128xf32>,
    %c0_15 = arith.constant 0 : index
    %c1 = arith.constant 1 : index
    %c0_16 = arith.constant 0 : index
    %c0_17 = arith.constant 0 : index
    %51 = vector.load %arg4[%c0_15, %c1, %c0_16, %c0_17] : memref<1x2x8x128xf32, #tpu.memory_space<vmem>>, vector<1x1x8x128xf32>
    %52 = vector.shape_cast %51 : vector<1x1x8x128xf32> to vector<8x128xf32>
    %53 = arith.addf %52, %44 : vector<8x128xf32>
    %c0_18 = arith.constant 0 : index
    %c1_19 = arith.constant 1 : index
    %c0_20 = arith.constant 0 : index
    %c0_21 = arith.constant 0 : index
    %54 = vector.load %arg4[%c0_18, %c1_19, %c0_20, %c0_21] : memref<1x2x8x128xf32, #tpu.memory_space<vmem>>, vector<1x1x8x128xf32>
    %55 = vector.shape_cast %54 : vector<1x1x8x128xf32> to vector<8x128xf32>
    %56 = vector.shape_cast %53 : vector<8x128xf32> to vector<1x1x8x128xf32>
    tpu.vector_store %arg4[%c0_18, %c1_19, %c0_20, %c0_21], %56 {strides = array<i32>} : memref<1x2x8x128xf32, #tpu.memory_space<vmem>>, vector<1x1x8x128xf32>,
    return
  }
  func.func @transform_0(%arg0: i32, %arg1: i32) -> (i32, i32, i32) {
    %c1_i32 = arith.constant 1 : i32
    %0 = arith.muli %arg0, %c1_i32 : i32
    %1 = arith.addi %0, %arg1 : i32
    %c0_i32 = arith.constant 0 : i32
    %c0_i32_0 = arith.constant 0 : i32
    %c0_i32_1 = arith.constant 0 : i32
    return %1, %c0_i32, %c0_i32_0 : i32, i32, i32
  }
  func.func @transform_1(%arg0: i32, %arg1: i32) -> (i32, i32, i32) {
    %c1_i32 = arith.constant 1 : i32
    %0 = arith.muli %arg0, %c1_i32 : i32
    %1 = arith.addi %0, %arg1 : i32
    %c0_i32 = arith.constant 0 : i32
    %c0_i32_0 = arith.constant 0 : i32
    %c0_i32_1 = arith.constant 0 : i32
    return %1, %c0_i32, %c0_i32_0 : i32, i32, i32
  }
  func.func @transform_2(%arg0: i32, %arg1: i32) -> (i32, i32, i32, i32) {
    %c0_i32 = arith.constant 0 : i32
    %c0_i32_0 = arith.constant 0 : i32
    %c0_i32_1 = arith.constant 0 : i32
    %c0_i32_2 = arith.constant 0 : i32
    return %arg0, %c0_i32, %c0_i32_0, %c0_i32_1 : i32, i32, i32, i32
  }
}

</mosaic_0001>

<llo_original>
// kernel: tpu_custom_call.1
$region0: #{tpu_custom_call.1}
  #allocation0 [shape = 'u32[]', space=smem, size = 0x4, offset = 0x4, fixed_abs, tag = 'smem constant byte address 0x4 - core index']
  #allocation1 [shape = 'u32[144,128]{1,0:T(1,128)}', space=vmem, size = 0x12000, scoped, tag = 'internal scratch']
  %s0 = inlined_call_operand.hbm [shape: f32[2,8,512], index: 0, kind: input, shape index: {}]
  %s1 = inlined_call_operand.hbm [shape: s32[2,1,512], index: 1, kind: input, shape index: {}]
  %s2 = inlined_call_operand.hbm [shape: f32[2,2,8,128], index: 2, kind: output, shape index: {}]
  %s3 = sld [smem:[#allocation0]]
  $region53: #{tpu_custom_call.1} parent=0
    _
  %s5 = ssub.s32 1, %s3
  %s6 = scalar_select 0, %s5, %s3
  $region1: #{tpu_custom_call.1} parent=0
    #allocation2 [shape = 'u8[32768]{0}', space=vmem, size = 0x8000, scoped, tag = 'input window, operand 0']
    #allocation3 [shape = 's32[2]{0}', space=sflag, size = 0x8, scoped, tag = 'scoped memory for tpu_custom_call.1']
    #allocation4 [shape = 's32[2]{0}', space=sflag, size = 0x8, scoped, tag = 'scoped memory for tpu_custom_call.1']
    #allocation5 [shape = 'u8[4096]{0}', space=vmem, size = 0x1000, scoped, tag = 'input window, operand 1']
    #allocation6 [shape = 's32[2]{0}', space=sflag, size = 0x8, scoped, tag = 'scoped memory for tpu_custom_call.1']
    #allocation7 [shape = 'u8[16384]{0}', space=vmem, size = 0x4000, scoped, tag = 'output window, operand 0']
    %7 = vsyncpa [#allocation3], 0
    %s8 = scalar_lea.sflag [#allocation3], 1
    %9 = vsyncpa %s8, 0
    %10 = vsyncpa [#allocation6], 0
    %s11 = scalar_lea.sflag [#allocation6], 1
    %12 = vsyncpa %s11, 0
    %13 = vsyncpa [#allocation4], 0
    %s14 = scalar_lea.sflag [#allocation4], 1
    %15 = vsyncpa %s14, 0
    loop: start=0, step=1, limit=4
    $region2: #{tpu_custom_call.1} parent=1 // loop_pre_header
      _
    $region3: #{tpu_custom_call.1} parent=1 // loop_header
      %s17 = sphi 0, %s21
      %p18 = scmp.ge.s32.totalorder %s17, 4
      %s24 = sphi 0, %s36
      %s25 = sphi 0, %s32
      %s26 = sphi 0, %s24
      %s27 = sphi 0, %s25
      %s28 = sphi 0, %s26
      %s29 = sphi 0, %s27
      %s41 = sphi 0, %s43
      %s44 = sphi 0, %s41
      %s45 = sphi 0, %s44
      %s61 = sphi 0, %s45
      %s69 = sphi 0, %s71
      %s72 = sphi 0, %s69
      %s73 = sphi 0, %s72
      %s89 = sphi 0, %s73
      %s95 = sphi 0, %s97
      %s98 = sphi 0, %s95
      %s99 = sphi 0, %s98
      %s115 = sphi 0, %s99
    $region4: #{tpu_custom_call.1} parent=1 // loop_header_branch
      %20 = sbr.rel (%p18) target = $region8
    $region5: #{tpu_custom_call.1} parent=1 // loop_body
      %s22 = ssub.s32 %s17, 1
      %s23 = ssub.s32 %s17, 2
      %s30 = sadd.s32 1, %s25
      %p31 = scmp.ge.s32.totalorder %s30, 1
      %s32 = scalar_select %p31, 0, %s30
      %s33 = sadd.s32 1, %s24
      %s34 = scalar_select %p31, %s33, %s24
      %p35 = scmp.ge.s32.totalorder %s34, 2
      %s36 = scalar_select %p35, 0, %s34
      %s37 = sadd.s32 %s24, %s25
      %s38 = sadd.s32 %s36, %s32
      %s39 = ssub.s32 %s37, %s38
      %p40 = scmp.eq.s32.totalorder %s39, 0
      %s42 = sadd.s32 %s41, 1
      %s43 = scalar_select %p40, %s41, %s42
      %p46 = pneg %p40
      %p47 = scmp.eq.s32.totalorder %s17, 1
      %p48 = por %p46, %p47
      %p49 = scmp.ne.s32.totalorder %s41, %s44
      %p50 = scmp.eq.s32.totalorder %s17, 0
      %p51 = por %p49, %p50
      %p52 = scmp.ne.s32.totalorder %s41, %s44
      %p53 = scmp.eq.s32.totalorder %s22, 1
      %p54 = por %p52, %p53
      %p55 = scmp.ne.s32.totalorder %s44, %s45
      %p56 = scmp.eq.s32.totalorder %s22, 0
      %p57 = por %p55, %p56
      %p58 = scmp.ne.s32.totalorder %s44, %s45
      %p59 = scmp.eq.s32.totalorder %s23, 1
      %p60 = por %p58, %p59
      %p62 = scmp.ne.s32.totalorder %s45, %s61
      %p63 = scmp.eq.s32.totalorder %s23, 0
      %p64 = por %p62, %p63
      %s65 = sadd.s32 %s24, %s25
      %s66 = sadd.s32 %s36, %s32
      %s67 = ssub.s32 %s65, %s66
      %p68 = scmp.eq.s32.totalorder %s67, 0
      %s70 = sadd.s32 %s69, 1
      %s71 = scalar_select %p68, %s69, %s70
      %p74 = pneg %p68
      %p75 = scmp.eq.s32.totalorder %s17, 1
      %p76 = por %p74, %p75
      %p77 = scmp.ne.s32.totalorder %s69, %s72
      %p78 = scmp.eq.s32.totalorder %s17, 0
      %p79 = por %p77, %p78
      %p80 = scmp.ne.s32.totalorder %s69, %s72
      %p81 = scmp.eq.s32.totalorder %s22, 1
      %p82 = por %p80, %p81
      %p83 = scmp.ne.s32.totalorder %s72, %s73
      %p84 = scmp.eq.s32.totalorder %s22, 0
      %p85 = por %p83, %p84
      %p86 = scmp.ne.s32.totalorder %s72, %s73
      %p87 = scmp.eq.s32.totalorder %s23, 1
      %p88 = por %p86, %p87
      %p90 = scmp.ne.s32.totalorder %s73, %s89
      %p91 = scmp.eq.s32.totalorder %s23, 0
      %p92 = por %p90, %p91
      %s93 = ssub.s32 %s24, %s36
      %p94 = scmp.eq.s32.totalorder %s93, 0
      %s96 = sadd.s32 %s95, 1
      %s97 = scalar_select %p94, %s95, %s96
      %p100 = pneg %p94
      %p101 = scmp.eq.s32.totalorder %s17, 1
      %p102 = por %p100, %p101
      %p103 = scmp.ne.s32.totalorder %s95, %s98
      %p104 = scmp.eq.s32.totalorder %s17, 0
      %p105 = por %p103, %p104
      %p106 = scmp.ne.s32.totalorder %s95, %s98
      %p107 = scmp.eq.s32.totalorder %s22, 1
      %p108 = por %p106, %p107
      %p109 = scmp.ne.s32.totalorder %s98, %s99
      %p110 = scmp.eq.s32.totalorder %s22, 0
      %p111 = por %p109, %p110
      %p112 = scmp.ne.s32.totalorder %s98, %s99
      %p113 = scmp.eq.s32.totalorder %s23, 1
      %p114 = por %p112, %p113
      %p116 = scmp.ne.s32.totalorder %s99, %s115
      %p117 = scmp.eq.s32.totalorder %s23, 0
      %p118 = por %p116, %p117
      %p119 = scmp.le.s32.totalorder 1, %s17
      %p120 = scmp.lt.s32.totalorder %s17, 3
      %p121 = pnand %p119, %p120
      %p122 = pneg %p121
      // Predicated region
      $region9: #{tpu_custom_call.1} parent=5 // pred_check
        _
      $region10: #{tpu_custom_call.1} parent=5 // pred_check_branch
        %124 = sbr.rel (%p121) target = $region12
      $region11: #{tpu_custom_call.1} parent=5 // pred_region
        %s125 = ssub.s32 %s17, 1
      $region12: #{tpu_custom_call.1} parent=5 // pred_fallthru
        _
      %p126 = scmp.lt.s32.totalorder %s17, 2
      // Predicated region
      $region13: #{tpu_custom_call.1} parent=5 // pred_check
        %p127 = pneg %p126
      $region14: #{tpu_custom_call.1} parent=5 // pred_check_branch
        %129 = sbr.rel (%p127) target = $region16
      $region15: #{tpu_custom_call.1} parent=5 // pred_region
        // Predicated region
        $region17: #{tpu_custom_call.1} parent=15 // pred_check
          %p130 = pneg %p51
        $region18: #{tpu_custom_call.1} parent=15 // pred_check_branch
          %132 = sbr.rel (%p130) target = $region20
        $region19: #{tpu_custom_call.1} parent=15 // pred_region
          %s133 = sand.u32 %s41, 1
          %s134 = scalar_lea.sflag [#allocation3], %s133
          %s135 = sand.u32 %s41, 1
          %s136 = smul.addr %s135, 32
          %s137 = scalar_lea.vmem [#allocation2], %s136
          %s138 = sadd.s32 %s24, %s25
          %s140 = ssub.s32 512, 512
          %141 = vsyncadd %s134, %s140
          %s142 = smul.addr %s138, 4
          %s143 = smul.addr %s142, 128
          %s144 = scalar_lea.hbm %s0, %s143
          %s146 = sshll.u32 %s137, 4
          %s147 = int_to_ptr.vmem [resolvable:$true] %s146
          %149 = dma.hbm_to_vmem [thread:$0]  %s144, 512, %s147, %s134
        $region20: #{tpu_custom_call.1} parent=15 // pred_fallthru
          _
        // Predicated region
        $region21: #{tpu_custom_call.1} parent=15 // pred_check
          %p150 = pneg %p79
        $region22: #{tpu_custom_call.1} parent=15 // pred_check_branch
          %152 = sbr.rel (%p150) target = $region24
        $region23: #{tpu_custom_call.1} parent=15 // pred_region
          %s153 = sand.u32 %s69, 1
          %s154 = scalar_lea.sflag [#allocation6], %s153
          %s155 = sand.u32 %s69, 1
          %s156 = smul.addr %s155, 4
          %s157 = scalar_lea.vmem [#allocation5], %s156
          %s158 = sadd.s32 %s24, %s25
          %s160 = ssub.s32 64, 64
          %161 = vsyncadd %s154, %s160
          %s162 = smul.addr %s158, 4
          %s163 = smul.addr %s162, 16
          %s164 = scalar_lea.hbm %s1, %s163
          %s166 = sshll.u32 %s157, 4
          %s167 = int_to_ptr.vmem [resolvable:$true] %s166
          %169 = dma.hbm_to_vmem [thread:$0]  %s164, 64, %s167, %s154
        $region24: #{tpu_custom_call.1} parent=15 // pred_fallthru
          _
      $region16: #{tpu_custom_call.1} parent=5 // pred_fallthru
        _
      %p170 = scmp.le.s32.totalorder 1, %s17
      %p171 = scmp.lt.s32.totalorder %s17, 3
      %p172 = pnand %p170, %p171
      %p173 = pneg %p172
      // Predicated region
      $region25: #{tpu_custom_call.1} parent=5 // pred_check
        _
      $region26: #{tpu_custom_call.1} parent=5 // pred_check_branch
        %175 = sbr.rel (%p172) target = $region28
      $region27: #{tpu_custom_call.1} parent=5 // pred_region
        %s176 = ssub.s32 %s17, 1
        %s177 = sand.u32 %s44, 1
        %s178 = scalar_lea.sflag [#allocation3], %s177
        %s179 = sand.u32 %s44, 1
        %s180 = smul.addr %s179, 32
        %s181 = scalar_lea.vmem [#allocation2], %s180
        // Predicated region
        $region29: #{tpu_custom_call.1} parent=27 // pred_check
          %p182 = pneg %p57
        $region30: #{tpu_custom_call.1} parent=27 // pred_check_branch
          %184 = sbr.rel (%p182) target = $region32
        $region31: #{tpu_custom_call.1} parent=27 // pred_region
          %185 = dma.done %s178, 512
        $region32: #{tpu_custom_call.1} parent=27 // pred_fallthru
          _
        %s186 = sand.u32 %s72, 1
        %s187 = scalar_lea.sflag [#allocation6], %s186
        %s188 = sand.u32 %s72, 1
        %s189 = smul.addr %s188, 4
        %s190 = scalar_lea.vmem [#allocation5], %s189
        // Predicated region
        $region33: #{tpu_custom_call.1} parent=27 // pred_check
          %p191 = pneg %p85
        $region34: #{tpu_custom_call.1} parent=27 // pred_check_branch
          %193 = sbr.rel (%p191) target = $region36
        $region35: #{tpu_custom_call.1} parent=27 // pred_region
          %194 = dma.done %s187, 64
        $region36: #{tpu_custom_call.1} parent=27 // pred_fallthru
          _
        %s195 = sand.u32 %s44, 1
        %s196 = scalar_lea.sflag [#allocation3], %s195
        %s197 = sand.u32 %s44, 1
        %s198 = smul.addr %s197, 32
        %s199 = scalar_lea.vmem [#allocation2], %s198
        %p200 = pneg %p57
        %p201 = pneg %p54
        %s202 = sand.u32 %s72, 1
        %s203 = scalar_lea.sflag [#allocation6], %s202
        %s204 = sand.u32 %s72, 1
        %s205 = smul.addr %s204, 4
        %s206 = scalar_lea.vmem [#allocation5], %s205
        %p207 = pneg %p85
        %p208 = pneg %p82
        %p209 = pneg %p111
        %p210 = pneg %p108
        %s211 = sand.u32 %s98, 1
        %s212 = scalar_lea.sflag [#allocation4], %s211
        %s213 = sand.u32 %s98, 1
        %s214 = smul.addr %s213, 16
        %s215 = scalar_lea.vmem [#allocation7], %s214
        %s216 = sadd.s32 %s26, %s27
        %s217 = sadd.s32 %s26, %s27
        %p218 = scmp.eq.s32.totalorder %s27, 0
        // Predicated region
        $region37: #{tpu_custom_call.1} parent=27 // pred_check
          %p219 = pneg %p218
        $region38: #{tpu_custom_call.1} parent=27 // pred_check_branch
          %221 = sbr.rel (%p219) target = $region40
        $region39: #{tpu_custom_call.1} parent=27 // pred_region
          %222 = vst [vmem:[%s215] sm:$0xff] 0.0
          %223 = vst [vmem:[%s215 + $0x8] sm:$0xff] 0.0
        $region40: #{tpu_custom_call.1} parent=27 // pred_fallthru
          _
        %v224 = vlaneseq
        %v225 = vshrl.u32 %v224, 7
        %v226 = vld [vmem:[%s181] sm:$0xff]
        %v227 = vld [vmem:[%s181 + $0x8] sm:$0xff]
        %v228 = vld [vmem:[%s181 + $0x10] sm:$0xff]
        %v229 = vld [vmem:[%s181 + $0x18] sm:$0xff]
        %v230 = vld [vmem:[%s190] sm:$0xf]
        %v231 = vrot.slane %v226, 4
        %v232 = vmax.f32 %v226, %v231
        %v233 = vrot.slane %v232, 2
        %v234 = vmax.f32 %v232, %v233
        %v235 = vrot.slane %v234, 1
        %v236 = vmax.f32 %v234, %v235
        %v237 = vrot.slane %v227, 4
        %v238 = vmax.f32 %v227, %v237
        %v239 = vrot.slane %v238, 2
        %v240 = vmax.f32 %v238, %v239
        %v241 = vrot.slane %v240, 1
        %v242 = vmax.f32 %v240, %v241
        %v243 = vrot.slane %v228, 4
        %v244 = vmax.f32 %v228, %v243
        %v245 = vrot.slane %v244, 2
        %v246 = vmax.f32 %v244, %v245
        %v247 = vrot.slane %v246, 1
        %v248 = vmax.f32 %v246, %v247
        %v249 = vrot.slane %v229, 4
        %v250 = vmax.f32 %v229, %v249
        %v251 = vrot.slane %v250, 2
        %v252 = vmax.f32 %v250, %v251
        %v253 = vrot.slane %v252, 1
        %v254 = vmax.f32 %v252, %v253
        %vm255 = vcmp.eq.f32.partialorder %v226, %v236
        %vm256 = vcmp.eq.f32.partialorder %v227, %v242
        %vm257 = vcmp.eq.f32.partialorder %v228, %v248
        %vm258 = vcmp.eq.f32.partialorder %v229, %v254
        %v259 = vsel %vm255, %v225, 8
        %v260 = vsel %vm256, %v225, 8
        %v261 = vsel %vm257, %v225, 8
        %v262 = vsel %vm258, %v225, 8
        %v263 = vrot.slane %v259, 4
        %vm264 = vcmp.lt.s32.totalorder %v259, %v263
        %v265 = vsel %vm264, %v259, %v263
        %v266 = vrot.slane %v265, 2
        %vm267 = vcmp.lt.s32.totalorder %v265, %v266
        %v268 = vsel %vm267, %v265, %v266
        %v269 = vrot.slane %v268, 1
        %vm270 = vcmp.lt.s32.totalorder %v268, %v269
        %v271 = vsel %vm270, %v268, %v269
        %v272 = vrot.slane %v260, 4
        %vm273 = vcmp.lt.s32.totalorder %v260, %v272
        %v274 = vsel %vm273, %v260, %v272
        %v275 = vrot.slane %v274, 2
        %vm276 = vcmp.lt.s32.totalorder %v274, %v275
        %v277 = vsel %vm276, %v274, %v275
        %v278 = vrot.slane %v277, 1
        %vm279 = vcmp.lt.s32.totalorder %v277, %v278
        %v280 = vsel %vm279, %v277, %v278
        %v281 = vrot.slane %v261, 4
        %vm282 = vcmp.lt.s32.totalorder %v261, %v281
        %v283 = vsel %vm282, %v261, %v281
        %v284 = vrot.slane %v283, 2
        %vm285 = vcmp.lt.s32.totalorder %v283, %v284
        %v286 = vsel %vm285, %v283, %v284
        %v287 = vrot.slane %v286, 1
        %vm288 = vcmp.lt.s32.totalorder %v286, %v287
        %v289 = vsel %vm288, %v286, %v287
        %v290 = vrot.slane %v262, 4
        %vm291 = vcmp.lt.s32.totalorder %v262, %v290
        %v292 = vsel %vm291, %v262, %v290
        %v293 = vrot.slane %v292, 2
        %vm294 = vcmp.lt.s32.totalorder %v292, %v293
        %v295 = vsel %vm294, %v292, %v293
        %v296 = vrot.slane %v295, 1
        %vm297 = vcmp.lt.s32.totalorder %v295, %v296
        %v298 = vsel %vm297, %v295, %v296
        %vm299 = vcmp.eq.s32.totalorder %v225, %v271
        %vm300 = vcmp.eq.s32.totalorder %v225, %v280
        %vm301 = vcmp.eq.s32.totalorder %v225, %v289
        %vm302 = vcmp.eq.s32.totalorder %v225, %v298
        %v303 = vsel %vm299, 1, 0
        %v304 = vsel %vm300, 1, 0
        %v305 = vsel %vm301, 1, 0
        %v306 = vsel %vm302, 1, 0
        %v307 = vcvt.s32.f32 %v303
        %v308 = vcvt.s32.f32 %v304
        %v309 = vcvt.s32.f32 %v305
        %v310 = vcvt.s32.f32 %v306
        %v311 = vlaneseq
        %v312 = vshrl.u32 %v311, 7
        %v313 = vsub.s32 0, %v312
        %v314 = vrot.slane %v230, %v313
        %v315 = vlaneseq
        %v316 = vshrl.u32 %v315, 7
        %v317 = vsub.s32 1, %v316
        %v318 = vrot.slane %v230, %v317
        %v319 = vlaneseq
        %v320 = vshrl.u32 %v319, 7
        %v321 = vsub.s32 2, %v320
        %v322 = vrot.slane %v230, %v321
        %v323 = vlaneseq
        %v324 = vshrl.u32 %v323, 7
        %v325 = vsub.s32 3, %v324
        %v326 = vrot.slane %v230, %v325
        %vm327 = vcmp.eq.s32.totalorder %v225, %v314
        %vm328 = vcmp.eq.s32.totalorder %v225, %v318
        %vm329 = vcmp.eq.s32.totalorder %v225, %v322
        %vm330 = vcmp.eq.s32.totalorder %v225, %v326
        %v331 = vsel %vm327, 1, 0
        %v332 = vsel %vm328, 1, 0
        %v333 = vsel %vm329, 1, 0
        %v334 = vsel %vm330, 1, 0
        %v335 = vcvt.s32.f32 %v331
        %v336 = vcvt.s32.f32 %v332
        %v337 = vcvt.s32.f32 %v333
        %v338 = vcvt.s32.f32 %v334
        %v339 = vmul.f32 %v307, %v335
        %v340 = vmul.f32 %v308, %v336
        %v341 = vmul.f32 %v309, %v337
        %v342 = vmul.f32 %v310, %v338
        %v343 = vadd.f32 %v307, %v335
        %v344 = vadd.f32 %v308, %v336
        %v345 = vadd.f32 %v309, %v337
        %v346 = vadd.f32 %v310, %v338
        %v347 = vadd.f32 %v339, 0.0
        %v348 = vadd.f32 %v343, 0.0
        %v349 = vadd.f32 %v347, %v340
        %v350 = vadd.f32 %v348, %v344
        %v351 = vadd.f32 %v349, %v341
        %v352 = vadd.f32 %v350, %v345
        %v353 = vadd.f32 %v351, %v342
        %v354 = vadd.f32 %v352, %v346
        %v355 = vld [vmem:[%s215] sm:$0xff]
        %v356 = vadd.f32 %v355, %v353
        %357 = vst [vmem:[%s215] sm:$0xff] %v356
        %s358 = scalar_lea.vmem %s215, 8 [#allocation7]
        %v359 = vld [vmem:[%s358] sm:$0xff]
        %v360 = vadd.f32 %v359, %v354
        %361 = vst [vmem:[%s358] sm:$0xff] %v360
        %s362 = sand.u32 %s98, 1
        %s363 = scalar_lea.sflag [#allocation4], %s362
        %s364 = sand.u32 %s98, 1
        %s365 = smul.addr %s364, 16
        %s366 = scalar_lea.vmem [#allocation7], %s365
        // Predicated region
        $region41: #{tpu_custom_call.1} parent=27 // pred_check
          %p367 = pneg %p108
        $region42: #{tpu_custom_call.1} parent=27 // pred_check_branch
          %369 = sbr.rel (%p367) target = $region44
        $region43: #{tpu_custom_call.1} parent=27 // pred_region
          %s371 = ssub.s32 256, 256
          %372 = vsyncadd %s363, %s371
          %s373 = smul.addr %s26, 2
          %s374 = smul.addr %s373, 128
          %s375 = scalar_lea.hbm %s2, %s374
          %s376 = sshll.u32 %s366, 4
          %s377 = int_to_ptr.vmem [resolvable:$true] %s376
          %382 = dma.vmem_to_hbm [thread:$0]  %s377, 256, %s375, %s363, 128, 128, 8
        $region44: #{tpu_custom_call.1} parent=27 // pred_fallthru
          _
      $region28: #{tpu_custom_call.1} parent=5 // pred_fallthru
        _
      %p383 = scmp.le.s32.totalorder 2, %s17
      // Predicated region
      $region45: #{tpu_custom_call.1} parent=5 // pred_check
        %p384 = pneg %p383
      $region46: #{tpu_custom_call.1} parent=5 // pred_check_branch
        %386 = sbr.rel (%p384) target = $region48
      $region47: #{tpu_custom_call.1} parent=5 // pred_region
        %s387 = ssub.s32 %s17, 2
        // Predicated region
        $region49: #{tpu_custom_call.1} parent=47 // pred_check
          %p388 = pneg %p114
        $region50: #{tpu_custom_call.1} parent=47 // pred_check_branch
          %390 = sbr.rel (%p388) target = $region52
        $region51: #{tpu_custom_call.1} parent=47 // pred_region
          %s391 = sand.u32 %s99, 1
          %s392 = scalar_lea.sflag [#allocation4], %s391
          %s393 = sand.u32 %s99, 1
          %s394 = smul.addr %s393, 16
          %s395 = scalar_lea.vmem [#allocation7], %s394
          %396 = dma.done %s392, 256
        $region52: #{tpu_custom_call.1} parent=47 // pred_fallthru
          _
      $region48: #{tpu_custom_call.1} parent=5 // pred_fallthru
        _
    $region6: #{tpu_custom_call.1} parent=1 // loop_footer
      %s21 = sadd.s32 1, %s17
    $region7: #{tpu_custom_call.1} parent=1 // loop_footer_branch
      %16 = sbr.rel target = $region3
    $region8: #{tpu_custom_call.1} parent=1 // loop_exit
      _
    %397 = vsyncpa [#allocation3], 1
    %s398 = scalar_lea.sflag [#allocation3], 1
    %399 = vsyncpa %s398, 1
    %400 = vsyncpa [#allocation6], 1
    %s401 = scalar_lea.sflag [#allocation6], 1
    %402 = vsyncpa %s401, 1
    %403 = vsyncpa [#allocation4], 1
    %s404 = scalar_lea.sflag [#allocation4], 1
    %405 = vsyncpa %s404, 1

</llo_original>
